<compile_context>
chip_gen: v5e
topology: v5e:2x2
jax: 0.10.0
libtpu: 0.0.40
codegen_flags: <defaults>
</compile_context>

<pallas_src>
import functools

import jax
import jax.numpy as jnp
from jax.experimental import pallas as pl
from jax.experimental.pallas import tpu as pltpu


def _round_up(v, m):
  return ((v + m - 1) // m) * m


def _gated_gcn_layer_kernel(x_ref, a_ref, wcat_ref, wih_ref,
                            brz_ref, bin_ref, bhn_ref, o_ref,
                            *, cp, matmul_dtype):
  """One GatedGraphConv layer per grid step (grid = (num_layers,)).

  x_ref    : [Np, Cp]       f32  initial node state (zero-padded), invariant
  a_ref    : [Np, Np]       md   dense adjacency, A[dst, src] = w_e, invariant
  wcat_ref : [1, Cp, 4*Cp]  md   per-layer slab [W_l | Whh_r | Whh_z | Whh_n]
  wih_ref  : [Cp, 3*Cp]     md   fused GRU input weights (gates r|z|n), invariant
  brz_ref  : [1, 2*Cp]      f32  pre-summed r,z biases (b_ih + b_hh), invariant
  bin_ref  : [1, Cp]        f32  b_ih for gate n, invariant
  bhn_ref  : [1, Cp]        f32  b_hh for gate n, invariant
  o_ref    : [Np, Cp]       f32  resident node-state accumulator (constant idx)
  """
  layer = pl.program_id(0)

  @pl.when(layer == 0)
  def _():
    o_ref[...] = x_ref[...]

  h = o_ref[...]                                    # [Np, Cp] fp32, resident
  hm = h.astype(matmul_dtype)

  # Fused h-LHS matmul: h @ [W_l | Whh_r | Whh_z | Whh_n]  -> [Np, 4*Cp]
  # (fp32 accumulation; 512-wide RHS fills the 256-wide MXU on v6e/v7x).
  g = jnp.dot(hm, wcat_ref[0], preferred_element_type=jnp.float32)
  m_pre = g[:, :cp]                                 # h @ W_l
  gh = g[:, cp:]                                    # h @ Whh (gates r|z|n)

  # Aggregate messages:  m = A @ (h @ W_l)
  m = jnp.dot(a_ref[...], m_pre.astype(matmul_dtype),
              preferred_element_type=jnp.float32)   # [Np, Cp]

  # GRU input-side gates: one [Np,Cp] x [Cp,3*Cp] matmul.
  gi = jnp.dot(m.astype(matmul_dtype), wih_ref[...],
               preferred_element_type=jnp.float32)  # [Np, 3*Cp]

  # Gate math in fp32 (v5e-safe); all slices are 128-lane aligned.
  rz = jax.nn.sigmoid(gi[:, :2 * cp] + gh[:, :2 * cp] + brz_ref[...])
  r = rz[:, :cp]
  z = rz[:, cp:]
  n = jnp.tanh(gi[:, 2 * cp:] + bin_ref[...] + r * (gh[:, 2 * cp:] + bhn_ref[...]))
  o_ref[...] = (1.0 - z) * n + z * h


def _vmem_limit_bytes(requested):
  """Generation-aware VMEM limit: ~7/8 of physical capacity, >= 32 MiB."""
  try:
    cap = int(pltpu.get_tpu_info().vmem_capacity_bytes)
  except Exception:  # fall back to the smallest generation (v7x: 64 MiB / TC)
    cap = 64 * 2**20
  ceiling = cap * 7 // 8          # headroom for compiler scratch / semaphores
  return int(min(max(requested, 32 * 2**20), ceiling))


@functools.partial(jax.jit, static_argnames=("num_layers", "matmul_dtype"))
def egat_conv_forward(x, edge_index, edge_attr, params, *, num_layers,
                      matmul_dtype=jnp.bfloat16):
  """GatedGraphConv forward. x: [N, F_in] (F_in <= C), edge_index: [2, E] int32,
  edge_attr: [E] scalar edge weights. Returns [N, C] float32."""
  W, Wih, Whh, bih, bhh = params
  L = num_layers
  C = W.shape[-1]
  N, f_in = x.shape

  itemsize = jnp.dtype(matmul_dtype).itemsize
  Cp = _round_up(C, 128)                       # lane-dense channel axis
  sub = 16 if itemsize == 2 else 8             # bf16 packs 16 sublanes / vreg
  Np = _round_up(max(N, sub), sub)

  # GatedGraphConv zero-pads node features up to out_channels (f_in <= C).
  x = x.astype(jnp.float32)
  x_pad = jnp.zeros((Np, Cp), jnp.float32).at[:N, :f_in].set(x)

  # Densify the edge list (index-based glue stays in plain JAX).
  # NOTE: A is cast to matmul_dtype (bf16 by default) — accumulation is fp32;
  # keep matmul_dtype=float32 if edge weights have a very wide dynamic range.
  src, dst = edge_index[0], edge_index[1]
  w_e = (jnp.ones((edge_index.shape[1],), jnp.float32)
         if edge_attr is None else edge_attr.astype(jnp.float32).reshape(-1))
  A = jnp.zeros((Np, Np), jnp.float32).at[dst, src].add(w_e)
  A = A.astype(matmul_dtype)

  # Zero-pad weights to the lane-dense channel size.
  def _pad_gate(w):   # [C, C] -> [Cp, Cp]
    return jnp.zeros((Cp, Cp), jnp.float32).at[:C, :C].set(w.astype(jnp.float32))

  W_pad = jnp.zeros((L, Cp, Cp), jnp.float32).at[:, :C, :C].set(
      W.astype(jnp.float32))                                      # [L, Cp, Cp]
  Whh_cat = jnp.concatenate([_pad_gate(Whh[k]) for k in range(3)],
                            axis=-1)                               # [Cp, 3*Cp]
  # Per-layer fused slab  [W_l | Whh_r | Whh_z | Whh_n]  (streamed per layer).
  Wcat = jnp.concatenate(
      [W_pad, jnp.broadcast_to(Whh_cat[None], (L, Cp, 3 * Cp))],
      axis=-1).astype(matmul_dtype)                                # [L, Cp, 4*Cp]
  Wih_cat = jnp.concatenate([_pad_gate(Wih[k]) for k in range(3)],
                            axis=-1).astype(matmul_dtype)          # [Cp, 3*Cp]

  def _pad_bias(b):   # [1, C] -> [1, Cp]
    return jnp.zeros((1, Cp), jnp.float32).at[:, :C].set(
        b.reshape(1, C).astype(jnp.float32))

  b_rz = jnp.concatenate([_pad_bias(bih[0] + bhh[0]),
                          _pad_bias(bih[1] + bhh[1])], axis=-1)    # [1, 2*Cp]
  b_in = _pad_bias(bih[2])                                         # [1, Cp]
  b_hn = _pad_bias(bhh[2])                                         # [1, Cp]

  # VMEM budget: invariants (x, A, Wih, biases, output; double-buffered by
  # default) + 2 streamed weight slabs + fp32 intermediates.
  invariant_bytes = (Np * Cp * 4                  # x
                     + Np * Np * itemsize         # A
                     + Cp * 3 * Cp * itemsize     # Wih_cat
                     + 4 * Cp * 4                 # biases
                     + Np * Cp * 4)               # resident output accumulator
  streamed_bytes = 2 * Cp * 4 * Cp * itemsize     # double-buffered W slab
  scratch_bytes = Np * (4 * Cp + 3 * Cp + 3 * Cp + 2 * Cp) * 4
  vmem_limit = _vmem_limit_bytes(2 * invariant_bytes + streamed_bytes
                                 + scratch_bytes + (1 << 20))

  kernel = functools.partial(_gated_gcn_layer_kernel, cp=Cp,
                             matmul_dtype=matmul_dtype)
  operands = (x_pad, A, Wcat, Wih_cat, b_rz, b_in, b_hn)
  out = pl.pallas_call(
      kernel,
      out_shape=jax.ShapeDtypeStruct((Np, Cp), jnp.float32),
      grid=(L,),
      in_specs=[
          pl.BlockSpec((Np, Cp), lambda l: (0, 0)),          # x       (invariant)
          pl.BlockSpec((Np, Np), lambda l: (0, 0)),          # A       (invariant)
          pl.BlockSpec((1, Cp, 4 * Cp), lambda l: (l, 0, 0)),  # W slab (streamed)
          pl.BlockSpec((Cp, 3 * Cp), lambda l: (0, 0)),      # Wih_cat (invariant)
          pl.BlockSpec((1, 2 * Cp), lambda l: (0, 0)),       # b_rz    (invariant)
          pl.BlockSpec((1, Cp), lambda l: (0, 0)),           # b_in    (invariant)
          pl.BlockSpec((1, Cp), lambda l: (0, 0)),           # b_hn    (invariant)
      ],
      out_specs=pl.BlockSpec((Np, Cp), lambda l: (0, 0)),    # resident h
      compiler_params=pltpu.CompilerParams(
          dimension_semantics=("arbitrary",),
          vmem_limit_bytes=vmem_limit),
  )(*operands)
  return out[:N, :C]


def _reference(x, A, params):
  """Pure-JAX reference of GatedGraphConv (for correctness check)."""
  W, Wih, Whh, bih, bhh = params
  h = x.astype(jnp.float32)
  for l in range(W.shape[0]):
    m = A @ (h @ W[l])
    r = jax.nn.sigmoid(m @ Wih[0] + bih[0] + h @ Whh[0] + bhh[0])
    z = jax.nn.sigmoid(m @ Wih[1] + bih[1] + h @ Whh[1] + bhh[1])
    n = jnp.tanh(m @ Wih[2] + bih[2] + r * (h @ Whh[2] + bhh[2]))
    h = (1.0 - z) * n + z * h
  return h


def init_params(key, out_channels, num_layers, has_bias=True):
  """Deterministic init matching the parameter shapes of GatedGraphConv + GRUCell."""
  C = out_channels
  k_w, k_ih, k_hh, k_bih, k_bhh = jax.random.split(key, 5)
  bound = 1.0 / jnp.sqrt(C)
  W = jax.random.uniform(k_w, (num_layers, C, C), jnp.float32, -bound, bound)
  Wih = jax.random.uniform(k_ih, (3, C, C), jnp.float32, -bound, bound)
  Whh = jax.random.uniform(k_hh, (3, C, C), jnp.float32, -bound, bound)
  if has_bias:
    bih = jax.random.uniform(k_bih, (3, 1, C), jnp.float32, -bound, bound)
    bhh = jax.random.uniform(k_bhh, (3, 1, C), jnp.float32, -bound, bound)
  else:
    bih = jnp.zeros((3, 1, C), jnp.float32)
    bhh = jnp.zeros((3, 1, C), jnp.float32)
  return W, Wih, Whh, bih, bhh


if __name__ == "__main__":
  key = jax.random.PRNGKey(0)

  # Small synthetic graph: layer_config.dim_in=32 (out_channels),
  # layer_config.dim_out=3 (num_layers), has_bias=True.
  N, C, L, E = 16, 32, 3, 40
  k_x, k_src, k_dst, k_ea, k_p = jax.random.split(key, 5)

  x = jax.random.normal(k_x, (N, C), jnp.float32)
  src = jax.random.randint(k_src, (E,), 0, N, jnp.int32)
  dst = jax.random.randint(k_dst, (E,), 0, N, jnp.int32)
  edge_index = jnp.stack([src, dst], axis=0)                  # [2, E]
  edge_attr = jax.random.uniform(k_ea, (E,), jnp.float32)     # scalar edge weights

  params = init_params(k_p, C, L, has_bias=True)

  # Pure-JAX reference.
  A_ref = jnp.zeros((N, N), jnp.float32).at[dst, src].add(edge_attr)
  ref = _reference(x, A_ref, params)

  # fp32 matmul path (v5e-friendly, wide-dynamic-range edge weights): tight tol.
  out_f32 = egat_conv_forward(x, edge_index, edge_attr, params, num_layers=L,
                              matmul_dtype=jnp.float32)
  out_f32 = jax.block_until_ready(out_f32)
  assert out_f32.shape == (N, C)
  assert jnp.allclose(out_f32, ref, atol=1e-4, rtol=1e-4), "fp32 mismatch vs reference"

  # Default bf16 matmul-operand path (MXU-native on v5e/v6e/v7x, fp32 accumulate
  # and fp32 gate math): looser tolerance.
  out_bf16 = egat_conv_forward(x, edge_index, edge_attr, params, num_layers=L)
  out_bf16 = jax.block_until_ready(out_bf16)
  assert out_bf16.shape == (N, C)
  assert bool(jnp.all(jnp.isfinite(out_bf16)))
  assert float(jnp.max(jnp.abs(out_bf16 - ref))) < 0.25, "bf16 mismatch vs reference"

  print("KERNEL_OK")
</pallas_src>

<mosaic_0001>
module attributes {stable_mosaic.version = 11 : i64} {
  func.func @_gated_gcn_layer_kernel(%arg0: i32, %arg1: memref<16x128xf32, #tpu.memory_space<vmem>>, %arg2: memref<16x16xf32, #tpu.memory_space<vmem>>, %arg3: memref<1x128x512xf32, #tpu.memory_space<vmem>>, %arg4: memref<128x384xf32, #tpu.memory_space<vmem>>, %arg5: memref<1x256xf32, #tpu.memory_space<vmem>>, %arg6: memref<1x128xf32, #tpu.memory_space<vmem>>, %arg7: memref<1x128xf32, #tpu.memory_space<vmem>>, %arg8: memref<16x128xf32, #tpu.memory_space<vmem>>) attributes {dimension_semantics = [#tpu.dimension_semantics<arbitrary>], iteration_bounds = array<i64: 3>, scalar_prefetch = 0 : i64, scratch_operands = 0 : i64, tpu.core_type = #tpu.core_type<tc>, window_params = [{pipeline_mode = #tpu.pipeline_mode<synchronous>, transform_indices = @transform_0, window_bounds = array<i64: 16, 128>}, {pipeline_mode = #tpu.pipeline_mode<synchronous>, transform_indices = @transform_1, window_bounds = array<i64: 16, 16>}, {transform_indices = @transform_2, window_bounds = array<i64: 1, 128, 512>}, {pipeline_mode = #tpu.pipeline_mode<synchronous>, transform_indices = @transform_3, window_bounds = array<i64: 128, 384>}, {pipeline_mode = #tpu.pipeline_mode<synchronous>, transform_indices = @transform_4, window_bounds = array<i64: 1, 256>}, {pipeline_mode = #tpu.pipeline_mode<synchronous>, transform_indices = @transform_5, window_bounds = array<i64: 1, 128>}, {pipeline_mode = #tpu.pipeline_mode<synchronous>, transform_indices = @transform_6, window_bounds = array<i64: 1, 128>}, {pipeline_mode = #tpu.pipeline_mode<synchronous>, transform_indices = @transform_7, window_bounds = array<i64: 16, 128>}]} {
    %c0_i32 = arith.constant 0 : i32
    %0 = arith.cmpi eq, %arg0, %c0_i32 : i32
    %1 = arith.extui %0 : i1 to i32
    %c0_i32_0 = arith.constant 0 : i32
    %2 = arith.cmpi ne, %1, %c0_i32_0 : i32
    scf.if %2 {
      %c0_21 = arith.constant 0 : index
      %c0_22 = arith.constant 0 : index
      %43 = vector.load %arg1[%c0_21, %c0_22] : memref<16x128xf32, #tpu.memory_space<vmem>>, vector<16x128xf32>
      %c0_23 = arith.constant 0 : index
      %c0_24 = arith.constant 0 : index
      %44 = vector.load %arg8[%c0_23, %c0_24] : memref<16x128xf32, #tpu.memory_space<vmem>>, vector<16x128xf32>
      tpu.vector_store %arg8[%c0_23, %c0_24], %43 {strides = array<i32>} : memref<16x128xf32, #tpu.memory_space<vmem>>, vector<16x128xf32>,
    } else {
    }
    %c0 = arith.constant 0 : index
    %c0_1 = arith.constant 0 : index
    %3 = vector.load %arg8[%c0, %c0_1] : memref<16x128xf32, #tpu.memory_space<vmem>>, vector<16x128xf32>
    %c0_2 = arith.constant 0 : index
    %c0_3 = arith.constant 0 : index
    %c0_4 = arith.constant 0 : index
    %4 = vector.load %arg3[%c0_2, %c0_3, %c0_4] : memref<1x128x512xf32, #tpu.memory_space<vmem>>, vector<1x128x512xf32>
    %5 = vector.shape_cast %4 : vector<1x128x512xf32> to vector<128x512xf32>
    %cst = arith.constant dense<0.000000e+00> : vector<16x512xf32>
    %6 = tpu.matmul %3, %5, %cst {dimension_numbers = #tpu.dot_dimension_numbers<[1], [0], [0], [1], [0, 0, 1, 1], [], []>} : vector<16x128xf32>, vector<128x512xf32>, vector<16x512xf32> -> vector<16x512xf32>
    %7 = vector.extract_strided_slice %6 {offsets = [0, 0], sizes = [16, 128], strides = [1, 1]} : vector<16x512xf32> to vector<16x128xf32>
    %8 = vector.extract_strided_slice %6 {offsets = [0, 128], sizes = [16, 384], strides = [1, 1]} : vector<16x512xf32> to vector<16x384xf32>
    %c0_5 = arith.constant 0 : index
    %c0_6 = arith.constant 0 : index
    %9 = vector.load %arg2[%c0_5, %c0_6] : memref<16x16xf32, #tpu.memory_space<vmem>>, vector<16x16xf32>
    %cst_7 = arith.constant dense<0.000000e+00> : vector<16x128xf32>
    %10 = tpu.matmul %9, %7, %cst_7 {dimension_numbers = #tpu.dot_dimension_numbers<[1], [0], [0], [1], [0, 0, 1, 1], [], []>} : vector<16x16xf32>, vector<16x128xf32>, vector<16x128xf32> -> vector<16x128xf32>
    %c0_8 = arith.constant 0 : index
    %c0_9 = arith.constant 0 : index
    %11 = vector.load %arg4[%c0_8, %c0_9] : memref<128x384xf32, #tpu.memory_space<vmem>>, vector<128x384xf32>
    %cst_10 = arith.constant dense<0.000000e+00> : vector<16x384xf32>
    %12 = tpu.matmul %10, %11, %cst_10 {dimension_numbers = #tpu.dot_dimension_numbers<[1], [0], [0], [1], [0, 0, 1, 1], [], []>} : vector<16x128xf32>, vector<128x384xf32>, vector<16x384xf32> -> vector<16x384xf32>
    %13 = vector.extract_strided_slice %12 {offsets = [0, 0], sizes = [16, 256], strides = [1, 1]} : vector<16x384xf32> to vector<16x256xf32>
    %14 = vector.extract_strided_slice %8 {offsets = [0, 0], sizes = [16, 256], strides = [1, 1]} : vector<16x384xf32> to vector<16x256xf32>
    %15 = arith.addf %13, %14 : vector<16x256xf32>
    %c0_11 = arith.constant 0 : index
    %c0_12 = arith.constant 0 : index
    %16 = vector.load %arg5[%c0_11, %c0_12] : memref<1x256xf32, #tpu.memory_space<vmem>>, vector<1x256xf32>
    %17 = vector.broadcast %16 : vector<1x256xf32> to vector<16x256xf32>
    %18 = arith.addf %15, %17 : vector<16x256xf32>
    %19 = arith.negf %18 : vector<16x256xf32>
    %20 = math.exp %19 : vector<16x256xf32>
    %cst_13 = arith.constant 1.000000e+00 : f32
    %21 = vector.broadcast %cst_13 : f32 to vector<16x256xf32>
    %22 = arith.addf %21, %20 : vector<16x256xf32>
    %23 = arith.divf %21, %22 : vector<16x256xf32>
    %24 = vector.extract_strided_slice %23 {offsets = [0, 0], sizes = [16, 128], strides = [1, 1]} : vector<16x256xf32> to vector<16x128xf32>
    %25 = vector.extract_strided_slice %23 {offsets = [0, 128], sizes = [16, 128], strides = [1, 1]} : vector<16x256xf32> to vector<16x128xf32>
    %26 = vector.extract_strided_slice %12 {offsets = [0, 256], sizes = [16, 128], strides = [1, 1]} : vector<16x384xf32> to vector<16x128xf32>
    %c0_14 = arith.constant 0 : index
    %c0_15 = arith.constant 0 : index
    %27 = vector.load %arg6[%c0_14, %c0_15] : memref<1x128xf32, #tpu.memory_space<vmem>>, vector<1x128xf32>
    %28 = vector.broadcast %27 : vector<1x128xf32> to vector<16x128xf32>
    %29 = arith.addf %26, %28 : vector<16x128xf32>
    %30 = vector.extract_strided_slice %8 {offsets = [0, 256], sizes = [16, 128], strides = [1, 1]} : vector<16x384xf32> to vector<16x128xf32>
    %c0_16 = arith.constant 0 : index
    %c0_17 = arith.constant 0 : index
    %31 = vector.load %arg7[%c0_16, %c0_17] : memref<1x128xf32, #tpu.memory_space<vmem>>, vector<1x128xf32>
    %32 = vector.broadcast %31 : vector<1x128xf32> to vector<16x128xf32>
    %33 = arith.addf %30, %32 : vector<16x128xf32>
    %34 = arith.mulf %24, %33 : vector<16x128xf32>
    %35 = arith.addf %29, %34 : vector<16x128xf32>
    %36 = math.tanh %35 : vector<16x128xf32>
    %cst_18 = arith.constant 1.000000e+00 : f32
    %37 = vector.broadcast %cst_18 : f32 to vector<16x128xf32>
    %38 = arith.subf %37, %25 : vector<16x128xf32>
    %39 = arith.mulf %38, %36 : vector<16x128xf32>
    %40 = arith.mulf %25, %3 : vector<16x128xf32>
    %41 = arith.addf %39, %40 : vector<16x128xf32>
    %c0_19 = arith.constant 0 : index
    %c0_20 = arith.constant 0 : index
    %42 = vector.load %arg8[%c0_19, %c0_20] : memref<16x128xf32, #tpu.memory_space<vmem>>, vector<16x128xf32>
    tpu.vector_store %arg8[%c0_19, %c0_20], %41 {strides = array<i32>} : memref<16x128xf32, #tpu.memory_space<vmem>>, vector<16x128xf32>,
    return
  }
  func.func @transform_0(%arg0: i32) -> (i32, i32) {
    %c0_i32 = arith.constant 0 : i32
    %c0_i32_0 = arith.constant 0 : i32
    %c0_i32_1 = arith.constant 0 : i32
    return %c0_i32, %c0_i32_0 : i32, i32
  }
  func.func @transform_1(%arg0: i32) -> (i32, i32) {
    %c0_i32 = arith.constant 0 : i32
    %c0_i32_0 = arith.constant 0 : i32
    %c0_i32_1 = arith.constant 0 : i32
    return %c0_i32, %c0_i32_0 : i32, i32
  }
  func.func @transform_2(%arg0: i32) -> (i32, i32, i32) {
    %c0_i32 = arith.constant 0 : i32
    %c0_i32_0 = arith.constant 0 : i32
    %c0_i32_1 = arith.constant 0 : i32
    return %arg0, %c0_i32, %c0_i32_0 : i32, i32, i32
  }
  func.func @transform_3(%arg0: i32) -> (i32, i32) {
    %c0_i32 = arith.constant 0 : i32
    %c0_i32_0 = arith.constant 0 : i32
    %c0_i32_1 = arith.constant 0 : i32
    return %c0_i32, %c0_i32_0 : i32, i32
  }
  func.func @transform_4(%arg0: i32) -> (i32, i32) {
    %c0_i32 = arith.constant 0 : i32
    %c0_i32_0 = arith.constant 0 : i32
    %c0_i32_1 = arith.constant 0 : i32
    return %c0_i32, %c0_i32_0 : i32, i32
  }
  func.func @transform_5(%arg0: i32) -> (i32, i32) {
    %c0_i32 = arith.constant 0 : i32
    %c0_i32_0 = arith.constant 0 : i32
    %c0_i32_1 = arith.constant 0 : i32
    return %c0_i32, %c0_i32_0 : i32, i32
  }
  func.func @transform_6(%arg0: i32) -> (i32, i32) {
    %c0_i32 = arith.constant 0 : i32
    %c0_i32_0 = arith.constant 0 : i32
    %c0_i32_1 = arith.constant 0 : i32
    return %c0_i32, %c0_i32_0 : i32, i32
  }
  func.func @transform_7(%arg0: i32) -> (i32, i32) {
    %c0_i32 = arith.constant 0 : i32
    %c0_i32_0 = arith.constant 0 : i32
    %c0_i32_1 = arith.constant 0 : i32
    return %c0_i32, %c0_i32_0 : i32, i32
  }
}

</mosaic_0001>

<llo_original>
// kernel: egat_conv_forward.1
$region0: #{egat_conv_forward.1}
  #allocation0 [shape = 'u32[]', space=smem, size = 0x4, offset = 0x4, fixed_abs, tag = 'smem constant byte address 0x4 - core index']
  #allocation1 [shape = 'u32[72,128]{1,0:T(1,128)}', space=vmem, size = 0x9000, scoped, tag = 'internal scratch']
  %s0 = inlined_call_operand.vmem [shape: f32[16,128], index: 0, kind: input, shape index: {}]
  %s1 = inlined_call_operand.vmem [shape: f32[16,16], index: 1, kind: input, shape index: {}]
  %s2 = inlined_call_operand.vmem [shape: f32[3,128,512], index: 2, kind: input, shape index: {}]
  %s3 = inlined_call_operand.vmem [shape: f32[128,384], index: 3, kind: input, shape index: {}]
  %s4 = inlined_call_operand.vmem [shape: f32[1,256], index: 4, kind: input, shape index: {}]
  %s5 = inlined_call_operand.vmem [shape: f32[1,128], index: 5, kind: input, shape index: {}]
  %s6 = inlined_call_operand.vmem [shape: f32[1,128], index: 6, kind: input, shape index: {}]
  %s7 = inlined_call_operand.hbm [shape: f32[16,128], index: 7, kind: output, shape index: {}]
  %s8 = sld [smem:[#allocation0]]
  $region65: #{egat_conv_forward.1} parent=0
    _
  %s10 = ssub.s32 1, %s8
  %s11 = scalar_select 0, %s10, %s8
  $region1: #{egat_conv_forward.1} parent=0
    #allocation2 [shape = 'u8[8192]{0}', space=vmem, size = 0x2000, scoped, tag = 'output window, operand 0, single buffered']
    #allocation3 [shape = 's32[2]{0}', space=sflag, size = 0x8, scoped, tag = 'scoped memory for egat_conv_forward.1']
    %12 = vsyncpa [#allocation3], 0
    loop: start=0, step=1, limit=5
    $region2: #{egat_conv_forward.1} parent=1 // loop_pre_header
      _
    $region3: #{egat_conv_forward.1} parent=1 // loop_header
      %s14 = sphi 0, %s18
      %p15 = scmp.ge.s32.totalorder %s14, 5
      %s22 = sphi 0, %s22
      %s24 = sphi 0, %s22
      %s25 = sphi 0, %s24
      %s39 = sphi 0, %s25
      %s43 = sphi 0, %s43
      %s45 = sphi 0, %s43
      %s46 = sphi 0, %s45
      %s60 = sphi 0, %s46
      %s66 = sphi 0, %s68
      %s69 = sphi 0, %s66
      %s70 = sphi 0, %s69
      %s86 = sphi 0, %s70
      %s90 = sphi 0, %s90
      %s92 = sphi 0, %s90
      %s93 = sphi 0, %s92
      %s107 = sphi 0, %s93
      %s111 = sphi 0, %s111
      %s113 = sphi 0, %s111
      %s114 = sphi 0, %s113
      %s128 = sphi 0, %s114
      %s132 = sphi 0, %s132
      %s134 = sphi 0, %s132
      %s135 = sphi 0, %s134
      %s149 = sphi 0, %s135
      %s153 = sphi 0, %s153
      %s155 = sphi 0, %s153
      %s156 = sphi 0, %s155
      %s170 = sphi 0, %s156
      %s174 = sphi 0, %s174
      %s176 = sphi 0, %s174
      %s177 = sphi 0, %s176
      %s191 = sphi 0, %s177
    $region4: #{egat_conv_forward.1} parent=1 // loop_header_branch
      %17 = sbr.rel (%p15) target = $region8
    $region5: #{egat_conv_forward.1} parent=1 // loop_body
      %s19 = ssub.s32 %s14, 1
      %s20 = ssub.s32 %s14, 2
      %s21 = sadd.s32 %s14, 1
      %s23 = sadd.s32 %s22, 1
      %p26 = scmp.eq.s32.totalorder %s14, 2
      %p27 = scmp.ne.s32.totalorder %s22, %s24
      %p28 = scmp.eq.s32.totalorder %s14, 0
      %p29 = por %p27, %p28
      %p30 = scmp.ne.s32.totalorder %s22, %s24
      %p31 = scmp.eq.s32.totalorder %s19, 2
      %p32 = por %p30, %p31
      %p33 = scmp.ne.s32.totalorder %s24, %s25
      %p34 = scmp.eq.s32.totalorder %s19, 0
      %p35 = por %p33, %p34
      %p36 = scmp.ne.s32.totalorder %s24, %s25
      %p37 = scmp.eq.s32.totalorder %s20, 2
      %p38 = por %p36, %p37
      %p40 = scmp.ne.s32.totalorder %s25, %s39
      %p41 = scmp.eq.s32.totalorder %s20, 0
      %p42 = por %p40, %p41
      %s44 = sadd.s32 %s43, 1
      %p47 = scmp.eq.s32.totalorder %s14, 2
      %p48 = scmp.ne.s32.totalorder %s43, %s45
      %p49 = scmp.eq.s32.totalorder %s14, 0
      %p50 = por %p48, %p49
      %p51 = scmp.ne.s32.totalorder %s43, %s45
      %p52 = scmp.eq.s32.totalorder %s19, 2
      %p53 = por %p51, %p52
      %p54 = scmp.ne.s32.totalorder %s45, %s46
      %p55 = scmp.eq.s32.totalorder %s19, 0
      %p56 = por %p54, %p55
      %p57 = scmp.ne.s32.totalorder %s45, %s46
      %p58 = scmp.eq.s32.totalorder %s20, 2
      %p59 = por %p57, %p58
      %p61 = scmp.ne.s32.totalorder %s46, %s60
      %p62 = scmp.eq.s32.totalorder %s20, 0
      %p63 = por %p61, %p62
      %s64 = ssub.s32 %s14, %s21
      %p65 = scmp.eq.s32.totalorder %s64, 0
      %s67 = sadd.s32 %s66, 1
      %s68 = scalar_select %p65, %s66, %s67
      %p71 = pneg %p65
      %p72 = scmp.eq.s32.totalorder %s14, 2
      %p73 = por %p71, %p72
      %p74 = scmp.ne.s32.totalorder %s66, %s69
      %p75 = scmp.eq.s32.totalorder %s14, 0
      %p76 = por %p74, %p75
      %p77 = scmp.ne.s32.totalorder %s66, %s69
      %p78 = scmp.eq.s32.totalorder %s19, 2
      %p79 = por %p77, %p78
      %p80 = scmp.ne.s32.totalorder %s69, %s70
      %p81 = scmp.eq.s32.totalorder %s19, 0
      %p82 = por %p80, %p81
      %p83 = scmp.ne.s32.totalorder %s69, %s70
      %p84 = scmp.eq.s32.totalorder %s20, 2
      %p85 = por %p83, %p84
      %p87 = scmp.ne.s32.totalorder %s70, %s86
      %p88 = scmp.eq.s32.totalorder %s20, 0
      %p89 = por %p87, %p88
      %s91 = sadd.s32 %s90, 1
      %p94 = scmp.eq.s32.totalorder %s14, 2
      %p95 = scmp.ne.s32.totalorder %s90, %s92
      %p96 = scmp.eq.s32.totalorder %s14, 0
      %p97 = por %p95, %p96
      %p98 = scmp.ne.s32.totalorder %s90, %s92
      %p99 = scmp.eq.s32.totalorder %s19, 2
      %p100 = por %p98, %p99
      %p101 = scmp.ne.s32.totalorder %s92, %s93
      %p102 = scmp.eq.s32.totalorder %s19, 0
      %p103 = por %p101, %p102
      %p104 = scmp.ne.s32.totalorder %s92, %s93
      %p105 = scmp.eq.s32.totalorder %s20, 2
      %p106 = por %p104, %p105
      %p108 = scmp.ne.s32.totalorder %s93, %s107
      %p109 = scmp.eq.s32.totalorder %s20, 0
      %p110 = por %p108, %p109
      %s112 = sadd.s32 %s111, 1
      %p115 = scmp.eq.s32.totalorder %s14, 2
      %p116 = scmp.ne.s32.totalorder %s111, %s113
      %p117 = scmp.eq.s32.totalorder %s14, 0
      %p118 = por %p116, %p117
      %p119 = scmp.ne.s32.totalorder %s111, %s113
      %p120 = scmp.eq.s32.totalorder %s19, 2
      %p121 = por %p119, %p120
      %p122 = scmp.ne.s32.totalorder %s113, %s114
      %p123 = scmp.eq.s32.totalorder %s19, 0
      %p124 = por %p122, %p123
      %p125 = scmp.ne.s32.totalorder %s113, %s114
      %p126 = scmp.eq.s32.totalorder %s20, 2
      %p127 = por %p125, %p126
      %p129 = scmp.ne.s32.totalorder %s114, %s128
      %p130 = scmp.eq.s32.totalorder %s20, 0
      %p131 = por %p129, %p130
      %s133 = sadd.s32 %s132, 1
      %p136 = scmp.eq.s32.totalorder %s14, 2
      %p137 = scmp.ne.s32.totalorder %s132, %s134
      %p138 = scmp.eq.s32.totalorder %s14, 0
      %p139 = por %p137, %p138
      %p140 = scmp.ne.s32.totalorder %s132, %s134
      %p141 = scmp.eq.s32.totalorder %s19, 2
      %p142 = por %p140, %p141
      %p143 = scmp.ne.s32.totalorder %s134, %s135
      %p144 = scmp.eq.s32.totalorder %s19, 0
      %p145 = por %p143, %p144
      %p146 = scmp.ne.s32.totalorder %s134, %s135
      %p147 = scmp.eq.s32.totalorder %s20, 2
      %p148 = por %p146, %p147
      %p150 = scmp.ne.s32.totalorder %s135, %s149
      %p151 = scmp.eq.s32.totalorder %s20, 0
      %p152 = por %p150, %p151
      %s154 = sadd.s32 %s153, 1
      %p157 = scmp.eq.s32.totalorder %s14, 2
      %p158 = scmp.ne.s32.totalorder %s153, %s155
      %p159 = scmp.eq.s32.totalorder %s14, 0
      %p160 = por %p158, %p159
      %p161 = scmp.ne.s32.totalorder %s153, %s155
      %p162 = scmp.eq.s32.totalorder %s19, 2
      %p163 = por %p161, %p162
      %p164 = scmp.ne.s32.totalorder %s155, %s156
      %p165 = scmp.eq.s32.totalorder %s19, 0
      %p166 = por %p164, %p165
      %p167 = scmp.ne.s32.totalorder %s155, %s156
      %p168 = scmp.eq.s32.totalorder %s20, 2
      %p169 = por %p167, %p168
      %p171 = scmp.ne.s32.totalorder %s156, %s170
      %p172 = scmp.eq.s32.totalorder %s20, 0
      %p173 = por %p171, %p172
      %s175 = sadd.s32 %s174, 1
      %p178 = scmp.eq.s32.totalorder %s14, 2
      %p179 = scmp.ne.s32.totalorder %s174, %s176
      %p180 = scmp.eq.s32.totalorder %s14, 0
      %p181 = por %p179, %p180
      %p182 = scmp.ne.s32.totalorder %s174, %s176
      %p183 = scmp.eq.s32.totalorder %s19, 2
      %p184 = por %p182, %p183
      %p185 = scmp.ne.s32.totalorder %s176, %s177
      %p186 = scmp.eq.s32.totalorder %s19, 0
      %p187 = por %p185, %p186
      %p188 = scmp.ne.s32.totalorder %s176, %s177
      %p189 = scmp.eq.s32.totalorder %s20, 2
      %p190 = por %p188, %p189
      %p192 = scmp.ne.s32.totalorder %s177, %s191
      %p193 = scmp.eq.s32.totalorder %s20, 0
      %p194 = por %p192, %p193
      %p195 = scmp.le.s32.totalorder 1, %s14
      %p196 = scmp.lt.s32.totalorder %s14, 4
      %p197 = pnand %p195, %p196
      %p198 = pneg %p197
      // Predicated region
      $region9: #{egat_conv_forward.1} parent=5 // pred_check
        _
      $region10: #{egat_conv_forward.1} parent=5 // pred_check_branch
        %200 = sbr.rel (%p197) target = $region12
      $region11: #{egat_conv_forward.1} parent=5 // pred_region
        %s201 = ssub.s32 %s14, 1
        // Predicated region
        $region13: #{egat_conv_forward.1} parent=11 // pred_check
          %p202 = pneg %p35
        $region14: #{egat_conv_forward.1} parent=11 // pred_check_branch
          %204 = sbr.rel (%p202) target = $region16
        $region15: #{egat_conv_forward.1} parent=11 // pred_region
          _
        $region16: #{egat_conv_forward.1} parent=11 // pred_fallthru
          _
        // Predicated region
        $region17: #{egat_conv_forward.1} parent=11 // pred_check
          %p205 = pneg %p56
        $region18: #{egat_conv_forward.1} parent=11 // pred_check_branch
          %207 = sbr.rel (%p205) target = $region20
        $region19: #{egat_conv_forward.1} parent=11 // pred_region
          _
        $region20: #{egat_conv_forward.1} parent=11 // pred_fallthru
          _
        // Predicated region
        $region21: #{egat_conv_forward.1} parent=11 // pred_check
          %p208 = pneg %p103
        $region22: #{egat_conv_forward.1} parent=11 // pred_check_branch
          %210 = sbr.rel (%p208) target = $region24
        $region23: #{egat_conv_forward.1} parent=11 // pred_region
          _
        $region24: #{egat_conv_forward.1} parent=11 // pred_fallthru
          _
        // Predicated region
        $region25: #{egat_conv_forward.1} parent=11 // pred_check
          %p211 = pneg %p124
        $region26: #{egat_conv_forward.1} parent=11 // pred_check_branch
          %213 = sbr.rel (%p211) target = $region28
        $region27: #{egat_conv_forward.1} parent=11 // pred_region
          _
        $region28: #{egat_conv_forward.1} parent=11 // pred_fallthru
          _
        // Predicated region
        $region29: #{egat_conv_forward.1} parent=11 // pred_check
          %p214 = pneg %p145
        $region30: #{egat_conv_forward.1} parent=11 // pred_check_branch
          %216 = sbr.rel (%p214) target = $region32
        $region31: #{egat_conv_forward.1} parent=11 // pred_region
          _
        $region32: #{egat_conv_forward.1} parent=11 // pred_fallthru
          _
        // Predicated region
        $region33: #{egat_conv_forward.1} parent=11 // pred_check
          %p217 = pneg %p166
        $region34: #{egat_conv_forward.1} parent=11 // pred_check_branch
          %219 = sbr.rel (%p217) target = $region36
        $region35: #{egat_conv_forward.1} parent=11 // pred_region
          _
        $region36: #{egat_conv_forward.1} parent=11 // pred_fallthru
          _
      $region12: #{egat_conv_forward.1} parent=5 // pred_fallthru
        _
      %p220 = scmp.lt.s32.totalorder %s14, 3
      // Predicated region
      $region37: #{egat_conv_forward.1} parent=5 // pred_check
        %p221 = pneg %p220
      $region38: #{egat_conv_forward.1} parent=5 // pred_check_branch
        %223 = sbr.rel (%p221) target = $region40
      $region39: #{egat_conv_forward.1} parent=5 // pred_region
        // Predicated region
        $region41: #{egat_conv_forward.1} parent=39 // pred_check
          %p224 = pneg %p76
        $region42: #{egat_conv_forward.1} parent=39 // pred_check_branch
          %226 = sbr.rel (%p224) target = $region44
        $region43: #{egat_conv_forward.1} parent=39 // pred_region
          %p227 = scmp.lt.s32.totalorder %s14, 2
          %s228 = scalar_select %p227, %s14, 2
          %s229 = smul.addr %s228, 64
          %s230 = smul.addr %s229, 8
          %s231 = scalar_lea.vmem %s2, %s230
        $region44: #{egat_conv_forward.1} parent=39 // pred_fallthru
          _
      $region40: #{egat_conv_forward.1} parent=5 // pred_fallthru
        _
      %p232 = scmp.le.s32.totalorder 1, %s14
      %p233 = scmp.lt.s32.totalorder %s14, 4
      %p234 = pnand %p232, %p233
      %p235 = pneg %p234
      // Predicated region
      $region45: #{egat_conv_forward.1} parent=5 // pred_check
        _
      $region46: #{egat_conv_forward.1} parent=5 // pred_check_branch
        %237 = sbr.rel (%p234) target = $region48
      $region47: #{egat_conv_forward.1} parent=5 // pred_region
        %s238 = ssub.s32 %s14, 1
        %p239 = pneg %p35
        %p240 = pneg %p32
        %p241 = pneg %p56
        %p242 = pneg %p53
        %p243 = scmp.lt.s32.totalorder %s19, 2
        %s244 = scalar_select %p243, %s19, 2
        %s245 = smul.addr %s244, 64
        %s246 = smul.addr %s245, 8
        %s247 = scalar_lea.vmem %s2, %s246
        %p248 = pneg %p82
        %p249 = pneg %p79
        %p250 = pneg %p103
        %p251 = pneg %p100
        %p252 = pneg %p124
        %p253 = pneg %p121
        %p254 = pneg %p145
        %p255 = pneg %p142
        %p256 = pneg %p166
        %p257 = pneg %p163
        %p258 = pneg %p187
        %p259 = pneg %p184
        %p260 = scmp.lt.s32.totalorder %s19, 2
        %s261 = scalar_select %p260, %s19, 2
        %s262 = smul.addr %s261, 64
        %s263 = smul.addr %s262, 8
        %s264 = scalar_lea.vmem %s2, %s263
        %p265 = scmp.eq.s32.totalorder %s19, 0
        // Predicated region
        $region49: #{egat_conv_forward.1} parent=47 // pred_check
          %p266 = pneg %p265
        $region50: #{egat_conv_forward.1} parent=47 // pred_check_branch
          %268 = sbr.rel (%p266) target = $region52
        $region51: #{egat_conv_forward.1} parent=47 // pred_region
          %v269 = vld [vmem:[%s0] sm:$0xff]
          %v270 = vld [vmem:[%s0 + $0x8] sm:$0xff]
          %271 = vst [vmem:[#allocation2] sm:$0xff] %v269
          %272 = vst [vmem:[#allocation2 + $0x8] sm:$0xff] %v270
        $region52: #{egat_conv_forward.1} parent=47 // pred_fallthru
          _
        %v273 = vld [vmem:[#allocation2] sm:$0xff]
        %v274 = vld [vmem:[#allocation2 + $0x8] sm:$0xff]
        %v275 = vld [vmem:[%s264] sm:$0xff]
        %v276 = vld [vmem:[%s264 + $0x8] sm:$0xff]
        %v277 = vld [vmem:[%s264 + $0x10] sm:$0xff]
        %v278 = vld [vmem:[%s264 + $0x18] sm:$0xff]
        %v279 = vld [vmem:[%s264 + $0x20] sm:$0xff]
        %v280 = vld [vmem:[%s264 + $0x28] sm:$0xff]
        %v281 = vld [vmem:[%s264 + $0x30] sm:$0xff]
        %v282 = vld [vmem:[%s264 + $0x38] sm:$0xff]
        %v283 = vld [vmem:[%s264 + $0x40] sm:$0xff]
        %v284 = vld [vmem:[%s264 + $0x48] sm:$0xff]
        %v285 = vld [vmem:[%s264 + $0x50] sm:$0xff]
        %v286 = vld [vmem:[%s264 + $0x58] sm:$0xff]
        %v287 = vld [vmem:[%s264 + $0x60] sm:$0xff]
        %v288 = vld [vmem:[%s264 + $0x68] sm:$0xff]
        %v289 = vld [vmem:[%s264 + $0x70] sm:$0xff]
        %v290 = vld [vmem:[%s264 + $0x78] sm:$0xff]
        %v291 = vld [vmem:[%s264 + $0x80] sm:$0xff]
        %v292 = vld [vmem:[%s264 + $0x88] sm:$0xff]
        %v293 = vld [vmem:[%s264 + $0x90] sm:$0xff]
        %v294 = vld [vmem:[%s264 + $0x98] sm:$0xff]
        %v295 = vld [vmem:[%s264 + $0xa0] sm:$0xff]
        %v296 = vld [vmem:[%s264 + $0xa8] sm:$0xff]
        %v297 = vld [vmem:[%s264 + $0xb0] sm:$0xff]
        %v298 = vld [vmem:[%s264 + $0xb8] sm:$0xff]
        %v299 = vld [vmem:[%s264 + $0xc0] sm:$0xff]
        %v300 = vld [vmem:[%s264 + $0xc8] sm:$0xff]
        %v301 = vld [vmem:[%s264 + $0xd0] sm:$0xff]
        %v302 = vld [vmem:[%s264 + $0xd8] sm:$0xff]
        %v303 = vld [vmem:[%s264 + $0xe0] sm:$0xff]
        %v304 = vld [vmem:[%s264 + $0xe8] sm:$0xff]
        %v305 = vld [vmem:[%s264 + $0xf0] sm:$0xff]
        %v306 = vld [vmem:[%s264 + $0xf8] sm:$0xff]
        %v307 = vld [vmem:[%s264 + $0x100] sm:$0xff]
        %v308 = vld [vmem:[%s264 + $0x108] sm:$0xff]
        %v309 = vld [vmem:[%s264 + $0x110] sm:$0xff]
        %v310 = vld [vmem:[%s264 + $0x118] sm:$0xff]
        %v311 = vld [vmem:[%s264 + $0x120] sm:$0xff]
        %v312 = vld [vmem:[%s264 + $0x128] sm:$0xff]
        %v313 = vld [vmem:[%s264 + $0x130] sm:$0xff]
        %v314 = vld [vmem:[%s264 + $0x138] sm:$0xff]
        %v315 = vld [vmem:[%s264 + $0x140] sm:$0xff]
        %v316 = vld [vmem:[%s264 + $0x148] sm:$0xff]
        %v317 = vld [vmem:[%s264 + $0x150] sm:$0xff]
        %v318 = vld [vmem:[%s264 + $0x158] sm:$0xff]
        %v319 = vld [vmem:[%s264 + $0x160] sm:$0xff]
        %v320 = vld [vmem:[%s264 + $0x168] sm:$0xff]
        %v321 = vld [vmem:[%s264 + $0x170] sm:$0xff]
        %v322 = vld [vmem:[%s264 + $0x178] sm:$0xff]
        %v323 = vld [vmem:[%s264 + $0x180] sm:$0xff]
        %v324 = vld [vmem:[%s264 + $0x188] sm:$0xff]
        %v325 = vld [vmem:[%s264 + $0x190] sm:$0xff]
        %v326 = vld [vmem:[%s264 + $0x198] sm:$0xff]
        %v327 = vld [vmem:[%s264 + $0x1a0] sm:$0xff]
        %v328 = vld [vmem:[%s264 + $0x1a8] sm:$0xff]
        %v329 = vld [vmem:[%s264 + $0x1b0] sm:$0xff]
        %v330 = vld [vmem:[%s264 + $0x1b8] sm:$0xff]
        %v331 = vld [vmem:[%s264 + $0x1c0] sm:$0xff]
        %v332 = vld [vmem:[%s264 + $0x1c8] sm:$0xff]
        %v333 = vld [vmem:[%s264 + $0x1d0] sm:$0xff]
        %v334 = vld [vmem:[%s264 + $0x1d8] sm:$0xff]
        %v335 = vld [vmem:[%s264 + $0x1e0] sm:$0xff]
        %v336 = vld [vmem:[%s264 + $0x1e8] sm:$0xff]
        %v337 = vld [vmem:[%s264 + $0x1f0] sm:$0xff]
        %v338 = vld [vmem:[%s264 + $0x1f8] sm:$0xff]
        %339 = vmatpush.msra.mxu0 %v335
        %340 = vmatpush.msra.mxu0 %v331
        %341 = vmatpush.msra.mxu0 %v327
        %342 = vmatpush.msra.mxu0 %v323
        %343 = vmatpush.msra.mxu0 %v319
        %344 = vmatpush.msra.mxu0 %v315
        %345 = vmatpush.msra.mxu0 %v311
        %346 = vmatpush.msra.mxu0 %v307
        %347 = vmatpush.msra.mxu0 %v303
        %348 = vmatpush.msra.mxu0 %v299
        %349 = vmatpush.msra.mxu0 %v295
        %350 = vmatpush.msra.mxu0 %v291
        %351 = vmatpush.msra.mxu0 %v287
        %352 = vmatpush.msra.mxu0 %v283
        %353 = vmatpush.msra.mxu0 %v279
        %354 = vmatpush.msra.mxu0 %v275
        %355 = vmatmul.f32.gmra.mxu0 %v273
        %v356 = vpop.f32.mrf.mxu0
        %v357 = vadd.f32 0.0, %v356
        %358 = vmatmul.f32.gmra.mxu0 %v274
        %v359 = vpop.f32.mrf.mxu0
        %v360 = vadd.f32 0.0, %v359
        %361 = vdwg.mxu0
        %362 = vmatpush.msra.mxu0 %v336
        %363 = vmatpush.msra.mxu0 %v332
        %364 = vmatpush.msra.mxu0 %v328
        %365 = vmatpush.msra.mxu0 %v324
        %366 = vmatpush.msra.mxu0 %v320
        %367 = vmatpush.msra.mxu0 %v316
        %368 = vmatpush.msra.mxu0 %v312
        %369 = vmatpush.msra.mxu0 %v308
        %370 = vmatpush.msra.mxu0 %v304
        %371 = vmatpush.msra.mxu0 %v300
        %372 = vmatpush.msra.mxu0 %v296
        %373 = vmatpush.msra.mxu0 %v292
        %374 = vmatpush.msra.mxu0 %v288
        %375 = vmatpush.msra.mxu0 %v284
        %376 = vmatpush.msra.mxu0 %v280
        %377 = vmatpush.msra.mxu0 %v276
        %378 = vmatmul.f32.gmra.mxu0 %v273
        %v379 = vpop.f32.mrf.mxu0
        %v380 = vadd.f32 0.0, %v379
        %381 = vmatmul.f32.gmra.mxu0 %v274
        %v382 = vpop.f32.mrf.mxu0
        %v383 = vadd.f32 0.0, %v382
        %384 = vdwg.mxu0
        %385 = vmatpush.msra.mxu0 %v337
        %386 = vmatpush.msra.mxu0 %v333
        %387 = vmatpush.msra.mxu0 %v329
        %388 = vmatpush.msra.mxu0 %v325
        %389 = vmatpush.msra.mxu0 %v321
        %390 = vmatpush.msra.mxu0 %v317
        %391 = vmatpush.msra.mxu0 %v313
        %392 = vmatpush.msra.mxu0 %v309
        %393 = vmatpush.msra.mxu0 %v305
        %394 = vmatpush.msra.mxu0 %v301
        %395 = vmatpush.msra.mxu0 %v297
        %396 = vmatpush.msra.mxu0 %v293
        %397 = vmatpush.msra.mxu0 %v289
        %398 = vmatpush.msra.mxu0 %v285
        %399 = vmatpush.msra.mxu0 %v281
        %400 = vmatpush.msra.mxu0 %v277
        %401 = vmatmul.f32.gmra.mxu0 %v273
        %v402 = vpop.f32.mrf.mxu0
        %v403 = vadd.f32 0.0, %v402
        %404 = vmatmul.f32.gmra.mxu0 %v274
        %v405 = vpop.f32.mrf.mxu0
        %v406 = vadd.f32 0.0, %v405
        %407 = vdwg.mxu0
        %408 = vmatpush.msra.mxu0 %v338
        %409 = vmatpush.msra.mxu0 %v334
        %410 = vmatpush.msra.mxu0 %v330
        %411 = vmatpush.msra.mxu0 %v326
        %412 = vmatpush.msra.mxu0 %v322
        %413 = vmatpush.msra.mxu0 %v318
        %414 = vmatpush.msra.mxu0 %v314
        %415 = vmatpush.msra.mxu0 %v310
        %416 = vmatpush.msra.mxu0 %v306
        %417 = vmatpush.msra.mxu0 %v302
        %418 = vmatpush.msra.mxu0 %v298
        %419 = vmatpush.msra.mxu0 %v294
        %420 = vmatpush.msra.mxu0 %v290
        %421 = vmatpush.msra.mxu0 %v286
        %422 = vmatpush.msra.mxu0 %v282
        %423 = vmatpush.msra.mxu0 %v278
        %424 = vmatmul.f32.gmra.mxu0 %v273
        %v425 = vpop.f32.mrf.mxu0
        %v426 = vadd.f32 0.0, %v425
        %427 = vmatmul.f32.gmra.mxu0 %v274
        %v428 = vpop.f32.mrf.mxu0
        %v429 = vadd.f32 0.0, %v428
        %430 = vdwg.mxu0
        %v431 = vld [vmem:[%s1] sm:$0xff]
        %v432 = vld [vmem:[%s1 + $0x8] sm:$0xff]
        %vm433 = vcmask 130048
        %v435 = vsel %vm433, %v431, 0
        %v438 = vsel %vm433, %v432, 0
        %440 = vmatpush.msra.mxu0 0.0
        %441 = vmatpush.msra.mxu0 0.0
        %442 = vmatpush.msra.mxu0 0.0
        %443 = vmatpush.msra.mxu0 0.0
        %444 = vmatpush.msra.mxu0 0.0
        %445 = vmatpush.msra.mxu0 0.0
        %446 = vmatpush.msra.mxu0 0.0
        %447 = vmatpush.msra.mxu0 0.0
        %448 = vmatpush.msra.mxu0 0.0
        %449 = vmatpush.msra.mxu0 0.0
        %450 = vmatpush.msra.mxu0 0.0
        %451 = vmatpush.msra.mxu0 0.0
        %452 = vmatpush.msra.mxu0 0.0
        %453 = vmatpush.msra.mxu0 0.0
        %454 = vmatpush.msra.mxu0 %v360
        %455 = vmatpush.msra.mxu0 %v357
        %456 = vmatmul.f32.gmra.mxu0 %v435
        %v457 = vpop.f32.mrf.mxu0
        %v458 = vadd.f32 0.0, %v457
        %459 = vmatmul.f32.gmra.mxu0 %v438
        %v460 = vpop.f32.mrf.mxu0
        %v461 = vadd.f32 0.0, %v460
        %462 = vdwg.mxu0
        %v463 = vld [vmem:[%s3] sm:$0xff]
        %v464 = vld [vmem:[%s3 + $0x8] sm:$0xff]
        %v465 = vld [vmem:[%s3 + $0x10] sm:$0xff]
        %v466 = vld [vmem:[%s3 + $0x18] sm:$0xff]
        %v467 = vld [vmem:[%s3 + $0x20] sm:$0xff]
        %v468 = vld [vmem:[%s3 + $0x28] sm:$0xff]
        %v469 = vld [vmem:[%s3 + $0x30] sm:$0xff]
        %v470 = vld [vmem:[%s3 + $0x38] sm:$0xff]
        %v471 = vld [vmem:[%s3 + $0x40] sm:$0xff]
        %v472 = vld [vmem:[%s3 + $0x48] sm:$0xff]
        %v473 = vld [vmem:[%s3 + $0x50] sm:$0xff]
        %v474 = vld [vmem:[%s3 + $0x58] sm:$0xff]
        %v475 = vld [vmem:[%s3 + $0x60] sm:$0xff]
        %v476 = vld [vmem:[%s3 + $0x68] sm:$0xff]
        %v477 = vld [vmem:[%s3 + $0x70] sm:$0xff]
        %v478 = vld [vmem:[%s3 + $0x78] sm:$0xff]
        %v479 = vld [vmem:[%s3 + $0x80] sm:$0xff]
        %v480 = vld [vmem:[%s3 + $0x88] sm:$0xff]
        %v481 = vld [vmem:[%s3 + $0x90] sm:$0xff]
        %v482 = vld [vmem:[%s3 + $0x98] sm:$0xff]
        %v483 = vld [vmem:[%s3 + $0xa0] sm:$0xff]
        %v484 = vld [vmem:[%s3 + $0xa8] sm:$0xff]
        %v485 = vld [vmem:[%s3 + $0xb0] sm:$0xff]
        %v486 = vld [vmem:[%s3 + $0xb8] sm:$0xff]
        %v487 = vld [vmem:[%s3 + $0xc0] sm:$0xff]
        %v488 = vld [vmem:[%s3 + $0xc8] sm:$0xff]
        %v489 = vld [vmem:[%s3 + $0xd0] sm:$0xff]
        %v490 = vld [vmem:[%s3 + $0xd8] sm:$0xff]
        %v491 = vld [vmem:[%s3 + $0xe0] sm:$0xff]
        %v492 = vld [vmem:[%s3 + $0xe8] sm:$0xff]
        %v493 = vld [vmem:[%s3 + $0xf0] sm:$0xff]
        %v494 = vld [vmem:[%s3 + $0xf8] sm:$0xff]
        %v495 = vld [vmem:[%s3 + $0x100] sm:$0xff]
        %v496 = vld [vmem:[%s3 + $0x108] sm:$0xff]
        %v497 = vld [vmem:[%s3 + $0x110] sm:$0xff]
        %v498 = vld [vmem:[%s3 + $0x118] sm:$0xff]
        %v499 = vld [vmem:[%s3 + $0x120] sm:$0xff]
        %v500 = vld [vmem:[%s3 + $0x128] sm:$0xff]
        %v501 = vld [vmem:[%s3 + $0x130] sm:$0xff]
        %v502 = vld [vmem:[%s3 + $0x138] sm:$0xff]
        %v503 = vld [vmem:[%s3 + $0x140] sm:$0xff]
        %v504 = vld [vmem:[%s3 + $0x148] sm:$0xff]
        %v505 = vld [vmem:[%s3 + $0x150] sm:$0xff]
        %v506 = vld [vmem:[%s3 + $0x158] sm:$0xff]
        %v507 = vld [vmem:[%s3 + $0x160] sm:$0xff]
        %v508 = vld [vmem:[%s3 + $0x168] sm:$0xff]
        %v509 = vld [vmem:[%s3 + $0x170] sm:$0xff]
        %v510 = vld [vmem:[%s3 + $0x178] sm:$0xff]
        %511 = vmatpush.msra.mxu0 %v508
        %512 = vmatpush.msra.mxu0 %v505
        %513 = vmatpush.msra.mxu0 %v502
        %514 = vmatpush.msra.mxu0 %v499
        %515 = vmatpush.msra.mxu0 %v496
        %516 = vmatpush.msra.mxu0 %v493
        %517 = vmatpush.msra.mxu0 %v490
        %518 = vmatpush.msra.mxu0 %v487
        %519 = vmatpush.msra.mxu0 %v484
        %520 = vmatpush.msra.mxu0 %v481
        %521 = vmatpush.msra.mxu0 %v478
        %522 = vmatpush.msra.mxu0 %v475
        %523 = vmatpush.msra.mxu0 %v472
        %524 = vmatpush.msra.mxu0 %v469
        %525 = vmatpush.msra.mxu0 %v466
        %526 = vmatpush.msra.mxu0 %v463
        %527 = vmatmul.f32.gmra.mxu0 %v458
        %v528 = vpop.f32.mrf.mxu0
        %v529 = vadd.f32 0.0, %v528
        %530 = vmatmul.f32.gmra.mxu0 %v461
        %v531 = vpop.f32.mrf.mxu0
        %v532 = vadd.f32 0.0, %v531
        %533 = vdwg.mxu0
        %534 = vmatpush.msra.mxu0 %v509
        %535 = vmatpush.msra.mxu0 %v506
        %536 = vmatpush.msra.mxu0 %v503
        %537 = vmatpush.msra.mxu0 %v500
        %538 = vmatpush.msra.mxu0 %v497
        %539 = vmatpush.msra.mxu0 %v494
        %540 = vmatpush.msra.mxu0 %v491
        %541 = vmatpush.msra.mxu0 %v488
        %542 = vmatpush.msra.mxu0 %v485
        %543 = vmatpush.msra.mxu0 %v482
        %544 = vmatpush.msra.mxu0 %v479
        %545 = vmatpush.msra.mxu0 %v476
        %546 = vmatpush.msra.mxu0 %v473
        %547 = vmatpush.msra.mxu0 %v470
        %548 = vmatpush.msra.mxu0 %v467
        %549 = vmatpush.msra.mxu0 %v464
        %550 = vmatmul.f32.gmra.mxu0 %v458
        %v551 = vpop.f32.mrf.mxu0
        %v552 = vadd.f32 0.0, %v551
        %553 = vmatmul.f32.gmra.mxu0 %v461
        %v554 = vpop.f32.mrf.mxu0
        %v555 = vadd.f32 0.0, %v554
        %556 = vdwg.mxu0
        %557 = vmatpush.msra.mxu0 %v510
        %558 = vmatpush.msra.mxu0 %v507
        %559 = vmatpush.msra.mxu0 %v504
        %560 = vmatpush.msra.mxu0 %v501
        %561 = vmatpush.msra.mxu0 %v498
        %562 = vmatpush.msra.mxu0 %v495
        %563 = vmatpush.msra.mxu0 %v492
        %564 = vmatpush.msra.mxu0 %v489
        %565 = vmatpush.msra.mxu0 %v486
        %566 = vmatpush.msra.mxu0 %v483
        %567 = vmatpush.msra.mxu0 %v480
        %568 = vmatpush.msra.mxu0 %v477
        %569 = vmatpush.msra.mxu0 %v474
        %570 = vmatpush.msra.mxu0 %v471
        %571 = vmatpush.msra.mxu0 %v468
        %572 = vmatpush.msra.mxu0 %v465
        %573 = vmatmul.f32.gmra.mxu0 %v458
        %v574 = vpop.f32.mrf.mxu0
        %v575 = vadd.f32 0.0, %v574
        %576 = vmatmul.f32.gmra.mxu0 %v461
        %v577 = vpop.f32.mrf.mxu0
        %v578 = vadd.f32 0.0, %v577
        %579 = vdwg.mxu0
        %v580 = vadd.f32 %v529, %v380
        %v581 = vadd.f32 %v552, %v403
        %v582 = vadd.f32 %v532, %v383
        %v583 = vadd.f32 %v555, %v406
        %v584 = vld [vmem:[%s4] sm:$0x3]
        %v586 = vperm.slane %v584, 0
        %v587 = vperm.slane %v584, 1
        %v590 = vadd.f32 %v580, %v586
        %v591 = vadd.f32 %v581, %v587
        %v592 = vadd.f32 %v582, %v586
        %v593 = vadd.f32 %v583, %v587
        %v594 = vxor.u32 %v590, 2147483648
        %v595 = vxor.u32 %v591, 2147483648
        %v596 = vxor.u32 %v592, 2147483648
        %v597 = vxor.u32 %v593, 2147483648
        %v598 = vmul.f32 %v594, 1.442695
        %v599 = vpow.pop %v598
        %v600 = vmul.f32 %v595, 1.442695
        %v601 = vpow.pop %v600
        %v602 = vmul.f32 %v596, 1.442695
        %v603 = vpow.pop %v602
        %v604 = vmul.f32 %v597, 1.442695
        %v605 = vpow.pop %v604
        %v606 = vadd.f32 %v599, 1.0
        %v607 = vadd.f32 %v601, 1.0
        %v608 = vadd.f32 %v603, 1.0
        %v609 = vadd.f32 %v605, 1.0
        %v610 = vrcp.pop %v606
        %v611 = vmul.f32 %v606, %v610
        %v612 = vsub.f32 1.0, %v611
        %v613 = vmul.f32 %v610, %v612
        %v614 = vadd.f32 %v610, %v613
        %vm615 = vweird.f32 %v606
        %vm616 = vweird.f32 %v610
        %vm617 = vmor %vm615, %vm616
        %v618 = vsel %vm617, %v610, %v614
        %v619 = vand.u32 2147483647, %v606
        %vm620 = vcmp.eq.f32.partialorder %v619, 8.507059e+37
        %v621 = vand.u32 %v606, 2147483648
        %v622 = vor.u32 1.1754944e-38, %v621
        %v623 = vsel %vm620, %v622, %v618
        %v624 = vmul.f32 1.0, %v623
        %v625 = vrcp.pop %v607
        %v626 = vmul.f32 %v607, %v625
        %v627 = vsub.f32 1.0, %v626
        %v628 = vmul.f32 %v625, %v627
        %v629 = vadd.f32 %v625, %v628
        %vm630 = vweird.f32 %v607
        %vm631 = vweird.f32 %v625
        %vm632 = vmor %vm630, %vm631
        %v633 = vsel %vm632, %v625, %v629
        %v634 = vand.u32 2147483647, %v607
        %vm635 = vcmp.eq.f32.partialorder %v634, 8.507059e+37
        %v636 = vand.u32 %v607, 2147483648
        %v637 = vor.u32 1.1754944e-38, %v636
        %v638 = vsel %vm635, %v637, %v633
        %v639 = vmul.f32 1.0, %v638
        %v640 = vrcp.pop %v608
        %v641 = vmul.f32 %v608, %v640
        %v642 = vsub.f32 1.0, %v641
        %v643 = vmul.f32 %v640, %v642
        %v644 = vadd.f32 %v640, %v643
        %vm645 = vweird.f32 %v608
        %vm646 = vweird.f32 %v640
        %vm647 = vmor %vm645, %vm646
        %v648 = vsel %vm647, %v640, %v644
        %v649 = vand.u32 2147483647, %v608
        %vm650 = vcmp.eq.f32.partialorder %v649, 8.507059e+37
        %v651 = vand.u32 %v608, 2147483648
        %v652 = vor.u32 1.1754944e-38, %v651
        %v653 = vsel %vm650, %v652, %v648
        %v654 = vmul.f32 1.0, %v653
        %v655 = vrcp.pop %v609
        %v656 = vmul.f32 %v609, %v655
        %v657 = vsub.f32 1.0, %v656
        %v658 = vmul.f32 %v655, %v657
        %v659 = vadd.f32 %v655, %v658
        %vm660 = vweird.f32 %v609
        %vm661 = vweird.f32 %v655
        %vm662 = vmor %vm660, %vm661
        %v663 = vsel %vm662, %v655, %v659
        %v664 = vand.u32 2147483647, %v609
        %vm665 = vcmp.eq.f32.partialorder %v664, 8.507059e+37
        %v666 = vand.u32 %v609, 2147483648
        %v667 = vor.u32 1.1754944e-38, %v666
        %v668 = vsel %vm665, %v667, %v663
        %v669 = vmul.f32 1.0, %v668
        %v670 = vld [vmem:[%s5] sm:$0x1]
        %v672 = vperm.slane %v670, 0
        %v674 = vadd.f32 %v575, %v672
        %v675 = vadd.f32 %v578, %v672
        %v676 = vld [vmem:[%s6] sm:$0x1]
        %v678 = vperm.slane %v676, 0
        %v680 = vadd.f32 %v426, %v678
        %v681 = vadd.f32 %v429, %v678
        %v682 = vmul.f32 %v624, %v680
        %v683 = vmul.f32 %v654, %v681
        %v684 = vadd.f32 %v674, %v682
        %v685 = vadd.f32 %v675, %v683
        %v686 = vtanh.pop %v684
        %v687 = vtanh.pop %v685
        %v688 = vsub.f32 1.0, %v639
        %v689 = vsub.f32 1.0, %v669
        %v690 = vmul.f32 %v688, %v686
        %v691 = vmul.f32 %v689, %v687
        %v692 = vmul.f32 %v639, %v273
        %v693 = vmul.f32 %v669, %v274
        %v694 = vadd.f32 %v690, %v692
        %v695 = vadd.f32 %v691, %v693
        %696 = vst [vmem:[#allocation2] sm:$0xff] %v694
        %697 = vst [vmem:[#allocation2 + $0x8] sm:$0xff] %v695
        // Predicated region
        $region53: #{egat_conv_forward.1} parent=47 // pred_check
          %p698 = pneg %p184
        $region54: #{egat_conv_forward.1} parent=47 // pred_check_branch
          %700 = sbr.rel (%p698) target = $region56
        $region55: #{egat_conv_forward.1} parent=47 // pred_region
          %702 = vsyncadd [#allocation3], 0
          %s703 = sshll.u32 [#allocation2], 4
          %s704 = int_to_ptr.vmem [resolvable:$true] %s703
          %s705 = sshll.u32 %s7, 4
          %s706 = int_to_ptr.hbm [resolvable:$true] %s705
          %711 = dma.vmem_to_hbm [thread:$0]  %s704, 256, %s706, [#allocation3], 128, 128, 8
        $region56: #{egat_conv_forward.1} parent=47 // pred_fallthru
          _
        // Predicated region
        $region57: #{egat_conv_forward.1} parent=47 // pred_check
          %p712 = pneg %p184
        $region58: #{egat_conv_forward.1} parent=47 // pred_check_branch
          %714 = sbr.rel (%p712) target = $region60
        $region59: #{egat_conv_forward.1} parent=47 // pred_region
          %716 = dma.done [#allocation3], 256
        $region60: #{egat_conv_forward.1} parent=47 // pred_fallthru
          _
      $region48: #{egat_conv_forward.1} parent=5 // pred_fallthru
        _
      %p717 = scmp.le.s32.totalorder 2, %s14
      // Predicated region
      $region61: #{egat_conv_forward.1} parent=5 // pred_check
        %p718 = pneg %p717
      $region62: #{egat_conv_forward.1} parent=5 // pred_check_branch
        %720 = sbr.rel (%p718) target = $region64
      $region63: #{egat_conv_forward.1} parent=5 // pred_region
        %s721 = ssub.s32 %s14, 2
      $region64: #{egat_conv_forward.1} parent=5 // pred_fallthru
        _
    $region6: #{egat_conv_forward.1} parent=1 // loop_footer
      %s18 = sadd.s32 1, %s14
    $region7: #{egat_conv_forward.1} parent=1 // loop_footer_branch
      %13 = sbr.rel target = $region3
    $region8: #{egat_conv_forward.1} parent=1 // loop_exit
      _
    %722 = vsyncpa [#allocation3], 1
    %s723 = scalar_lea.sflag [#allocation3], 1
    %724 = vsyncpa %s723, 1

</llo_original>
